<compile_context>
chip_gen: v5e
topology: v5e:2x2
jax: 0.10.0
libtpu: 0.0.40
codegen_flags: <defaults>
</compile_context>

<pallas_src>
import math

import jax
import jax.numpy as jnp
from jax.experimental import pallas as pl
from jax.experimental.pallas import tpu as pltpu

_TARGET_BLOCK_BYTES = 2 * 1024 * 1024  # 2 MiB/block -> 8 MiB double-buffered footprint (< all scoped-VMEM defaults)


def _copy_kernel(x_ref, o_ref):
    # Whole-tile copy: "device transfer" == materialize through VMEM unchanged.
    o_ref[...] = x_ref[...]


def tensor_to_device(x):
    """Pallas equivalent of tensorToDevice.forward: identity copy on TPU.

    Presents the input as a lane-dense (rows, lanes) view, streams it through VMEM in
    large row blocks (partial last block clamped by Pallas), and restores the original
    shape.  Values / shape / dtype are unchanged.
    """
    orig_shape = x.shape
    dtype = x.dtype
    total = math.prod(orig_shape) if orig_shape else 1
    if total == 0:
        return x

    itemsize = jnp.dtype(dtype).itemsize
    sub = max(8, 32 // itemsize)  # dtype-aware sublane pack: 8 f32, 16 bf16, 32 int8/fp8

    # Pick a lane-dense last dim (multiple of 128) that divides the element count so the
    # 2-D view is a metadata-only reshape (no XLA pad/slice passes).
    lanes = None
    for cand in (512, 256, 128):
        if total % cand == 0:
            lanes = cand
            break

    padded = False
    if lanes is None:
        # Ragged fallback: minimal (<128 elem) pad so a lane-dense 2-D layout exists.
        # TODO(synk): handle the ragged tail in-kernel (masked pltpu.store) to avoid the
        # XLA pad/slice materializations for unaligned sizes.
        lanes = 128
        pad_n = (-total) % lanes
        flat = jnp.pad(x.reshape(-1), (0, pad_n))
        rows = (total + pad_n) // lanes
        x2d = flat.reshape(rows, lanes)
        padded = True
    else:
        rows = total // lanes
        x2d = x.reshape(rows, lanes)  # contiguous reshape: no HBM copy

    # Row-block sizing: multiple of the sublane pack, capped to ~2 MiB per block.
    max_rows = max(sub, (_TARGET_BLOCK_BYTES // (lanes * itemsize)) // sub * sub)
    if rows <= max_rows:
        block_rows = rows        # single full-extent block; (8,128) divisibility not required
    else:
        block_rows = max_rows    # multiple of sub (>=8); last block may be partial (clamped)

    grid = (pl.cdiv(rows, block_rows),)

    out2d = pl.pallas_call(
        _copy_kernel,
        out_shape=jax.ShapeDtypeStruct((rows, lanes), dtype),
        grid_spec=pl.GridSpec(
            grid=grid,
            in_specs=[pl.BlockSpec((block_rows, lanes), lambda i: (i, 0))],
            out_specs=pl.BlockSpec((block_rows, lanes), lambda i: (i, 0)),
        ),
        cost_estimate=pl.CostEstimate(
            flops=0,
            transcendentals=0,
            bytes_accessed=2 * rows * lanes * itemsize,
        ),
        compiler_params=pltpu.CompilerParams(
            dimension_semantics=("parallel",),
        ),
    )(x2d)

    if padded:
        return out2d.reshape(-1)[:total].reshape(orig_shape)
    return out2d.reshape(orig_shape)


if __name__ == "__main__":
    key = jax.random.PRNGKey(0)
    # Small NCHW input consistent with typical usage of this transform.
    x = jax.random.normal(key, (2, 4, 16, 16), dtype=jnp.float32)

    y = tensor_to_device(x)
    y = jax.block_until_ready(y)

    # Identity check: forward must return the tensor unchanged.
    assert y.shape == x.shape and y.dtype == x.dtype
    assert bool(jnp.all(y == x))
    print("KERNEL_OK")
</pallas_src>

<mosaic_0001>
module attributes {stable_mosaic.version = 11 : i64} {
  func.func @_copy_kernel(%arg0: i32, %arg1: memref<4x512xf32, #tpu.memory_space<vmem>>, %arg2: memref<4x512xf32, #tpu.memory_space<vmem>>) attributes {dimension_semantics = [#tpu.dimension_semantics<parallel>], iteration_bounds = array<i64: 1>, scalar_prefetch = 0 : i64, scratch_operands = 0 : i64, tpu.core_type = #tpu.core_type<tc>, window_params = [{transform_indices = @transform_0, window_bounds = array<i64: 4, 512>}, {transform_indices = @transform_1, window_bounds = array<i64: 4, 512>}]} {
    %c0 = arith.constant 0 : index
    %c0_0 = arith.constant 0 : index
    %0 = vector.load %arg1[%c0, %c0_0] : memref<4x512xf32, #tpu.memory_space<vmem>>, vector<4x512xf32>
    %c0_1 = arith.constant 0 : index
    %c0_2 = arith.constant 0 : index
    %1 = vector.load %arg2[%c0_1, %c0_2] : memref<4x512xf32, #tpu.memory_space<vmem>>, vector<4x512xf32>
    tpu.vector_store %arg2[%c0_1, %c0_2], %0 {strides = array<i32>} : memref<4x512xf32, #tpu.memory_space<vmem>>, vector<4x512xf32>,
    return
  }
  func.func @transform_0(%arg0: i32) -> (i32, i32) {
    %c0_i32 = arith.constant 0 : i32
    %c0_i32_0 = arith.constant 0 : i32
    return %arg0, %c0_i32 : i32, i32
  }
  func.func @transform_1(%arg0: i32) -> (i32, i32) {
    %c0_i32 = arith.constant 0 : i32
    %c0_i32_0 = arith.constant 0 : i32
    return %arg0, %c0_i32 : i32, i32
  }
}

</mosaic_0001>

<llo_original>
// kernel: tpu_custom_call.1
$region0: #{tpu_custom_call.1}
  #allocation0 [shape = 'u32[]', space=smem, size = 0x4, offset = 0x4, fixed_abs, tag = 'smem constant byte address 0x4 - core index']
  #allocation1 [shape = 'u32[72,128]{1,0:T(1,128)}', space=vmem, size = 0x9000, scoped, tag = 'internal scratch']
  %s0 = inlined_call_operand.hbm [shape: f32[4,512], index: 0, kind: input, shape index: {}]
  %s1 = inlined_call_operand.hbm [shape: f32[4,512], index: 1, kind: output, shape index: {}]
  %s2 = sld [smem:[#allocation0]]
  $region18: #{tpu_custom_call.1} parent=0
    _
  %s4 = ssub.s32 1, %s2
  %s5 = scalar_select 0, %s4, %s2
  $region1: #{tpu_custom_call.1} parent=0
    #allocation2 [shape = 'u8[8192]{0}', space=vmem, size = 0x2000, scoped, tag = 'input window, operand 0, single buffered']
    #allocation3 [shape = 's32[1]{0}', space=sflag, size = 0x4, scoped, tag = 'scoped memory for tpu_custom_call.1']
    #allocation4 [shape = 's32[1]{0}', space=sflag, size = 0x4, scoped, tag = 'scoped memory for tpu_custom_call.1']
    #allocation5 [shape = 'u8[8192]{0}', space=vmem, size = 0x2000, scoped, tag = 'output window, operand 0, single buffered']
    %6 = vsyncpa [#allocation3], 0
    %7 = vsyncpa [#allocation4], 0
    // Predicated region
    $region2: #{tpu_custom_call.1} parent=1 // pred_check
      _
    $region3: #{tpu_custom_call.1} parent=1 // pred_check_branch
      %9 = sbr.rel (0) target = $region5
    $region4: #{tpu_custom_call.1} parent=1 // pred_region
      %11 = vsyncadd [#allocation3], 0
      %s13 = sshll.u32 %s0, 4
      %s14 = int_to_ptr.hbm [resolvable:$true] %s13
      %s15 = sshll.u32 [#allocation2], 4
      %s16 = int_to_ptr.vmem [resolvable:$true] %s15
      %18 = dma.hbm_to_vmem [thread:$0]  %s14, 256, %s16, [#allocation3]
    $region5: #{tpu_custom_call.1} parent=1 // pred_fallthru
      _
    // Predicated region
    $region6: #{tpu_custom_call.1} parent=1 // pred_check
      _
    $region7: #{tpu_custom_call.1} parent=1 // pred_check_branch
      %20 = sbr.rel (0) target = $region9
    $region8: #{tpu_custom_call.1} parent=1 // pred_region
      %22 = dma.done [#allocation3], 256
    $region9: #{tpu_custom_call.1} parent=1 // pred_fallthru
      _
    %v23 = vld [vmem:[#allocation2] sm:$0xff]
    %v24 = vld [vmem:[#allocation2 + $0x8] sm:$0xff]
    %25 = vst [vmem:[#allocation5] sm:$0xff] %v23
    %26 = vst [vmem:[#allocation5 + $0x8] sm:$0xff] %v24
    // Predicated region
    $region10: #{tpu_custom_call.1} parent=1 // pred_check
      _
    $region11: #{tpu_custom_call.1} parent=1 // pred_check_branch
      %28 = sbr.rel (0) target = $region13
    $region12: #{tpu_custom_call.1} parent=1 // pred_region
      %30 = vsyncadd [#allocation4], 0
      %s32 = sshll.u32 [#allocation5], 4
      %s33 = int_to_ptr.vmem [resolvable:$true] %s32
      %s34 = sshll.u32 %s1, 4
      %s35 = int_to_ptr.hbm [resolvable:$true] %s34
      %37 = dma.vmem_to_hbm [thread:$0]  %s33, 256, %s35, [#allocation4]
    $region13: #{tpu_custom_call.1} parent=1 // pred_fallthru
      _
    // Predicated region
    $region14: #{tpu_custom_call.1} parent=1 // pred_check
      _
    $region15: #{tpu_custom_call.1} parent=1 // pred_check_branch
      %39 = sbr.rel (0) target = $region17
    $region16: #{tpu_custom_call.1} parent=1 // pred_region
      %41 = dma.done [#allocation4], 256
    $region17: #{tpu_custom_call.1} parent=1 // pred_fallthru
      _
    %42 = vsyncpa [#allocation3], 1
    %43 = vsyncpa [#allocation4], 1

</llo_original>
